<compile_context>
chip_gen: v5e
topology: v5e:2x2
jax: 0.10.0
libtpu: 0.0.40
codegen_flags: <defaults>
</compile_context>

<pallas_src>
from functools import partial

import jax
import jax.numpy as jnp
from jax.experimental import pallas as pl
from jax.experimental.pallas import tpu as pltpu

_SELU_ALPHA = 1.6732632423543772
_SELU_SCALE = 1.0507009873554805


def _selu(x):
    return _SELU_SCALE * jnp.where(
        x > 0, x, _SELU_ALPHA * (jnp.exp(jnp.minimum(x, 0.0)) - 1.0))


def _cparams(semantics, vmem_limit):
    return pltpu.CompilerParams(
        dimension_semantics=tuple(semantics),
        vmem_limit_bytes=int(vmem_limit))


def _gen_config():
    """Per-generation lane-tile cap and scoped-VMEM budget."""
    try:
        kind = jax.devices()[0].device_kind.lower()
    except Exception:
        kind = ""
    if "v7" in kind or "7x" in kind:            # v7x: 64 MiB VMEM / 2 TCs
        return {"tile_cap": 4096, "vmem_limit": 40 * 1024 * 1024}
    return {"tile_cap": 8192, "vmem_limit": 64 * 1024 * 1024}   # v5e / v6e


def _hw_tile(hw, cap):
    """HW lane-tile: full extent if small or not 128-aligned, else a 128-aligned
    cap; grids use pl.cdiv so a partial last tile is handled by masked writeback."""
    if hw <= cap or hw % 128 != 0:
        return hw
    return max(cap - cap % 128, 128)


# ---------------------------------------------------------------------------
# Kernel 1a: GlobalAvgPool over HW, per batch (feeds the Channel_Tracer gate).
# ---------------------------------------------------------------------------
def _gap_kernel(x_ref, o_ref):
    o_ref[...] = jnp.mean(x_ref[...], axis=-1, keepdims=True)        # (C, 1)


def global_avg_pool(x, *, vmem_limit):
    B, C, HW = x.shape
    return pl.pallas_call(
        _gap_kernel,
        out_shape=jax.ShapeDtypeStruct((B, C, 1), jnp.float32),
        grid=(B,),
        in_specs=[pl.BlockSpec((None, C, HW), lambda b: (b, 0, 0))],
        out_specs=pl.BlockSpec((None, C, 1), lambda b: (b, 0, 0)),
        compiler_params=_cparams(("parallel",), vmem_limit),
    )(x)


# ---------------------------------------------------------------------------
# Kernel 1b: batch-dense channel attention -> gate = sigmoid(att) + 1.
# wq/wk/wv are concatenated into one (C, 3C) weight -> a single MXU matmul for
# all batches (no per-batch 1-row matmul chain).
# ---------------------------------------------------------------------------
def _gate_kernel(gap_ref, s_ref, t_ref, wqkv_ref, wfc_ref, o_ref, *, C):
    xn = gap_ref[...] * s_ref[...] + t_ref[...]                       # BN (eval), (B, C)
    qkv = jnp.dot(xn, wqkv_ref[...], preferred_element_type=jnp.float32)   # (B, 3C)
    q, k, v = qkv[:, :C], qkv[:, C:2 * C], qkv[:, 2 * C:]
    logits = q[:, :, None] * k[:, None, :]                            # (B, C, C) == q @ k^T
    logits = logits - jnp.max(logits, axis=-1, keepdims=True)
    e = jnp.exp(logits)
    alpha = e / jnp.sum(e, axis=-1, keepdims=True)                    # softmax(dim=-1)
    att = jnp.sum(alpha * v[:, None, :], axis=-1)                     # alpha @ v -> (B, C)
    att = jnp.dot(att, wfc_ref[...], preferred_element_type=jnp.float32)
    o_ref[...] = 1.0 / (1.0 + jnp.exp(-att)) + 1.0                    # sigmoid(att) + 1


def channel_gate(gap, s, t, wqkvT, wfcT, *, vmem_limit):
    B, C = gap.shape
    return pl.pallas_call(
        partial(_gate_kernel, C=C),
        out_shape=jax.ShapeDtypeStruct((B, C), jnp.float32),
        grid=(1,),
        in_specs=[
            pl.BlockSpec((B, C), lambda i: (0, 0)),
            pl.BlockSpec((1, C), lambda i: (0, 0)),
            pl.BlockSpec((1, C), lambda i: (0, 0)),
            pl.BlockSpec((C, 3 * C), lambda i: (0, 0)),
            pl.BlockSpec((C, C), lambda i: (0, 0)),
        ],
        out_specs=pl.BlockSpec((B, C), lambda i: (0, 0)),
        compiler_params=_cparams(("arbitrary",), vmem_limit),
    )(gap, s.reshape(1, C), t.reshape(1, C), wqkvT, wfcT)


# ---------------------------------------------------------------------------
# Kernel 2: fused multi-branch depthwise conv + folded BN + SELU, optional
# fused Channel_Tracer gate.  The image stays flattened (C, H*W): every tap is
# a static lane roll (XLU) of the whole row plus a precomputed border mask, so
# all VALU work and all stores are lane-dense and no padded copy ever exists.
# Output is (B, NB, C, HW) (bf16) so the 1x1 convs consume it with no relayout.
# ---------------------------------------------------------------------------
def _dw_body(x, gate, taps_ref, bias_ref, masks_ref, o_ref, cfgs, W):
    HW = x.shape[-1]
    t = 0
    for br, (k, p, d) in enumerate(cfgs):
        acc = None
        for dy in range(k):
            for dx in range(k):
                ro, co = dy * d - p, dx * d - p
                delta = ro * W + co
                v = x if delta == 0 else pltpu.roll(x, shift=(-delta) % HW, axis=1)
                contrib = v * taps_ref[:, pl.ds(t, 1)]                # BN scale folded
                if ro != 0 or co != 0:
                    contrib = contrib * masks_ref[pl.ds(t, 1), :]     # zero-pad border
                acc = contrib if acc is None else acc + contrib
                t += 1
        if gate is not None:
            acc = acc * gate                                          # conv_dw(x*g) = g*conv_dw(x)
        o_ref[br] = _selu(acc + bias_ref[:, pl.ds(br, 1)]).astype(o_ref.dtype)


def _dw_gate_kernel(x_ref, gate_ref, taps_ref, bias_ref, masks_ref, o_ref, *, cfgs, W):
    _dw_body(x_ref[...], gate_ref[...], taps_ref, bias_ref, masks_ref, o_ref, cfgs, W)


def _dw_plain_kernel(x_ref, taps_ref, bias_ref, masks_ref, o_ref, *, cfgs, W):
    _dw_body(x_ref[...], None, taps_ref, bias_ref, masks_ref, o_ref, cfgs, W)


def fused_depthwise(x, taps, bias, masks, cfgs, *, W, gate=None, vmem_limit,
                    out_dtype=jnp.bfloat16):
    # NOTE(v7x): grid is (B,) — with tiny B only one TC gets work; a channel-group
    # grid axis would shard it further but is unnecessary at these sizes.
    B, C, HW = x.shape
    NB = len(cfgs)
    nt = taps.shape[1]
    in_specs = [pl.BlockSpec((None, C, HW), lambda b: (b, 0, 0))]
    args = [x]
    if gate is not None:
        in_specs.append(pl.BlockSpec((None, C, 1), lambda b: (b, 0, 0)))
        args.append(gate)
    in_specs += [
        pl.BlockSpec((C, nt), lambda b: (0, 0)),
        pl.BlockSpec((C, NB), lambda b: (0, 0)),
        pl.BlockSpec((nt, HW), lambda b: (0, 0)),
    ]
    args += [taps, bias, masks]
    kern = _dw_gate_kernel if gate is not None else _dw_plain_kernel
    return pl.pallas_call(
        partial(kern, cfgs=tuple(cfgs), W=W),
        out_shape=jax.ShapeDtypeStruct((B, NB, C, HW), out_dtype),
        grid=(B,),
        in_specs=in_specs,
        out_specs=pl.BlockSpec((None, NB, C, HW), lambda b: (b, 0, 0, 0)),
        compiler_params=_cparams(("parallel",), vmem_limit),
    )(*args)


# ---------------------------------------------------------------------------
# Kernel 3a: pointwise (1x1) conv + folded BN + SELU.  Per-batch
# (Cout,Cin)@(Cin,tile) MXU matmul; weight pre-cast to bf16 and resident across
# HW tiles; f32 accumulation / epilogue.
# ---------------------------------------------------------------------------
def _pw_kernel(x_ref, w_ref, s_ref, t_ref, o_ref):
    y = jnp.dot(w_ref[...], x_ref[...], preferred_element_type=jnp.float32)
    o_ref[...] = _selu(y * s_ref[...] + t_ref[...])


def pointwise(x, w_bf16, s, t, *, tile_cap, vmem_limit):
    B, Cin, HW = x.shape
    Cout = w_bf16.shape[0]
    t_hw = _hw_tile(HW, tile_cap)
    grid = (B, pl.cdiv(HW, t_hw))
    return pl.pallas_call(
        _pw_kernel,
        out_shape=jax.ShapeDtypeStruct((B, Cout, HW), jnp.float32),
        grid=grid,
        in_specs=[
            pl.BlockSpec((None, Cin, t_hw), lambda b, i: (b, 0, i)),
            pl.BlockSpec((Cout, Cin), lambda b, i: (0, 0)),
            pl.BlockSpec((Cout, 1), lambda b, i: (0, 0)),
            pl.BlockSpec((Cout, 1), lambda b, i: (0, 0)),
        ],
        out_specs=pl.BlockSpec((None, Cout, t_hw), lambda b, i: (b, 0, i)),
        compiler_params=_cparams(("parallel", "parallel"), vmem_limit),
    )(x, w_bf16, s.reshape(Cout, 1), t.reshape(Cout, 1))


# ---------------------------------------------------------------------------
# Kernel 3b: the four branch 1x1 reductions (C -> C/4) + BN + SELU fused with
# the "+ skip" add.  Grid (B, branch, tile): per-branch weights (no block-diag
# zero FLOPs), branch/batch/tile axes all "parallel" (v7x 2-TC sharding).
# ---------------------------------------------------------------------------
def _pw_skip_kernel(x_ref, skip_ref, w_ref, s_ref, t_ref, o_ref):
    y = jnp.dot(w_ref[...], x_ref[...], preferred_element_type=jnp.float32)
    o_ref[...] = _selu(y * s_ref[...] + t_ref[...]) + skip_ref[...]


def branch_pointwise_skip(d_all, skip, w_stack_bf16, s_stack, t_stack, *,
                          tile_cap, vmem_limit):
    B, NB, C, HW = d_all.shape
    C4 = w_stack_bf16.shape[1]
    skip_r = skip.reshape(B, NB, C4, HW)          # channel c -> (branch, sub-channel)
    t_hw = _hw_tile(HW, tile_cap)
    grid = (B, NB, pl.cdiv(HW, t_hw))
    out = pl.pallas_call(
        _pw_skip_kernel,
        out_shape=jax.ShapeDtypeStruct((B, NB, C4, HW), jnp.float32),
        grid=grid,
        in_specs=[
            pl.BlockSpec((None, None, C, t_hw), lambda b, r, i: (b, r, 0, i)),
            pl.BlockSpec((None, None, C4, t_hw), lambda b, r, i: (b, r, 0, i)),
            pl.BlockSpec((None, C4, C), lambda b, r, i: (r, 0, 0)),
            pl.BlockSpec((None, C4, 1), lambda b, r, i: (r, 0, 0)),
            pl.BlockSpec((None, C4, 1), lambda b, r, i: (r, 0, 0)),
        ],
        out_specs=pl.BlockSpec((None, None, C4, t_hw), lambda b, r, i: (b, r, 0, i)),
        compiler_params=_cparams(("parallel", "parallel", "parallel"), vmem_limit),
    )(d_all, skip_r, w_stack_bf16, s_stack, t_stack)
    return out.reshape(B, NB * C4, HW)


# ---------------------------------------------------------------------------
# Kernel 4: final BasicConv2d(C -> 1, 1x1) + BN + SELU + ReLU fused with the
# x + edge residual.  Channel-weighted sublane-sum (one jnp.sum), one pass
# over x, edge written alongside.
# ---------------------------------------------------------------------------
def _final_kernel(em_ref, x_ref, w_ref, t_ref, xo_ref, e_ref):
    e = jnp.sum(em_ref[...] * w_ref[...], axis=0, keepdims=True)      # (1, HW)
    e = jnp.maximum(_selu(e + t_ref[...]), 0.0)                       # BN shift, SELU, ReLU
    e_ref[...] = e
    xo_ref[...] = x_ref[...] + e                                      # residual (bcast over C)


def final_edge_residual(edge_m, x, w_fold, t_out, *, vmem_limit):
    B, C, HW = x.shape
    x_out, edge = pl.pallas_call(
        _final_kernel,
        out_shape=(jax.ShapeDtypeStruct((B, C, HW), jnp.float32),
                   jax.ShapeDtypeStruct((B, 1, HW), jnp.float32)),
        grid=(B,),
        in_specs=[
            pl.BlockSpec((None, C, HW), lambda b: (b, 0, 0)),
            pl.BlockSpec((None, C, HW), lambda b: (b, 0, 0)),
            pl.BlockSpec((C, 1), lambda b: (0, 0)),
            pl.BlockSpec((1, 1), lambda b: (0, 0)),
        ],
        out_specs=(pl.BlockSpec((None, C, HW), lambda b: (b, 0, 0)),
                   pl.BlockSpec((None, 1, HW), lambda b: (b, 0, 0))),
        compiler_params=_cparams(("parallel",), vmem_limit),
    )(edge_m, x, w_fold, t_out.reshape(1, 1))
    return x_out, edge


# ---------------------------------------------------------------------------
# Host-side helpers: folded taps, border masks, radial FFT mask, parameters
# ---------------------------------------------------------------------------
def _fold_taps(dw_ws, bn_scales):
    """Per-branch (C,k,k) depthwise weights * per-channel BN scale -> (C, sum k*k)."""
    cols = []
    for dw_w, s in zip(dw_ws, bn_scales):
        C = dw_w.shape[0]
        kk = dw_w.shape[1] * dw_w.shape[2]
        cols.append(dw_w.reshape(C, kk) * s[:, None])
    return jnp.concatenate(cols, axis=1).astype(jnp.float32)


def _tap_masks(cfgs, H, W):
    """Per-tap validity masks (zero-padding semantics) for the rolled flat image."""
    ii = jnp.arange(H, dtype=jnp.int32)[:, None]
    jj = jnp.arange(W, dtype=jnp.int32)[None, :]
    rows = []
    for (k, p, d) in cfgs:
        for dy in range(k):
            for dx in range(k):
                ro, co = dy * d - p, dx * d - p
                m = ((ii + ro >= 0) & (ii + ro < H) & (jj + co >= 0) & (jj + co < W))
                rows.append(m.reshape(H * W))
    return jnp.stack(rows).astype(jnp.float32)          # (n_taps, HW)


def radial_mask(H, W, r):
    # Matches mask_radial/distance: imageSize = rows for BOTH coordinates.
    ii = jnp.arange(H, dtype=jnp.float32)[:, None]
    jj = jnp.arange(W, dtype=jnp.float32)[None, :]
    dis = jnp.sqrt((ii - H / 2.0) ** 2 + (jj - H / 2.0) ** 2)
    return (dis < r).astype(jnp.float32)


def _bn_fold(key, c, eps=1e-5):
    k1, k2, k3, k4 = jax.random.split(key, 4)
    gamma = 1.0 + 0.1 * jax.random.normal(k1, (c,), jnp.float32)
    beta = 0.1 * jax.random.normal(k2, (c,), jnp.float32)
    mean = 0.1 * jax.random.normal(k3, (c,), jnp.float32)
    var = 0.5 + jax.random.uniform(k4, (c,), jnp.float32)
    scale = gamma / jnp.sqrt(var + eps)
    shift = beta - mean * scale
    return scale, shift


def init_params(key, channel):
    C = channel
    C4 = C // 4
    p = {}
    keys = jax.random.split(key, 40)
    ki = iter(keys)
    w = lambda shape: 0.1 * jax.random.normal(next(ki), shape, jnp.float32)

    # UnionAttentionModule(channel, only_channel_tracing=True) -> Channel_Tracer
    p["uam_norm"] = _bn_fold(next(ki), C)                       # eval BN; Dropout3d = id
    wq, wk, wv, wfc = w((C, C)), w((C, C)), w((C, C)), w((C, C))
    p["uam_wqkvT"] = jnp.concatenate([wq.T, wk.T, wv.T], axis=1)  # (C, 3C)
    p["uam_wfcT"] = wfc.T

    # DWSConv(channel, channel, kernel=3, padding=1, kernels_per_layer=1)
    p["dws_dw_w"] = w((C, 3, 3))
    p["dws_bn1"] = _bn_fold(next(ki), C)
    p["dws_pw_w_bf16"] = w((C, C)).astype(jnp.bfloat16)         # pre-cast (MXU operand)
    p["dws_bn2"] = _bn_fold(next(ki), C)

    # DWConv1..4 branches: (ksize, padding, dilation) + BasicConv2d(C, C//4, 1)
    p["branch_cfg"] = [(1, 0, 1), (3, 1, 1), (3, 3, 3), (3, 5, 5)]
    dw_ws, dw_bns, pw_ws, pw_ss, pw_ts = [], [], [], [], []
    for (k_, pad, dil) in p["branch_cfg"]:
        dw_ws.append(w((C, k_, k_)))
        dw_bns.append(_bn_fold(next(ki), C))
        pw_ws.append(w((C4, C)))
        sb, tb = _bn_fold(next(ki), C4)
        pw_ss.append(sb)
        pw_ts.append(tb)
    p["branch_dw_w"] = dw_ws
    p["branch_dw_bn"] = dw_bns
    p["branch_pw_w_bf16"] = jnp.stack(pw_ws).astype(jnp.bfloat16)    # (NB, C4, C)
    p["branch_pw_s"] = jnp.stack(pw_ss).reshape(len(pw_ss), C4, 1)
    p["branch_pw_t"] = jnp.stack(pw_ts).reshape(len(pw_ts), C4, 1)

    # final BasicConv2d(channel, 1, 1)
    p["out_w"] = w((1, C))
    p["out_bn"] = _bn_fold(next(ki), 1)
    return p


# ---------------------------------------------------------------------------
# Forward
# ---------------------------------------------------------------------------
def frequency_edge_forward(x, params, radius):
    gen = _gen_config()
    tile_cap, vmem = gen["tile_cap"], gen["vmem_limit"]
    B, C, H, W = x.shape
    HW = H * W

    # --- high-frequency extraction ---
    # TODO(synk): complex 2-D FFT / fftshift has no Pallas primitive; kept in plain JAX.
    x_fft = jnp.fft.fftshift(jnp.fft.fft2(x, axes=(-2, -1)))        # all axes (torch default)
    mask = radial_mask(H, W, radius)
    x_back = jnp.fft.ifft2(jnp.fft.ifftshift(x_fft * (1.0 - mask)), axes=(-2, -1))
    x_H = jnp.abs(x_back).astype(jnp.float32).reshape(B, C, HW)

    # --- UAM.Channel_Tracer: emit only the (B, C) gate (applied in the DWS kernel) ---
    s0, t0 = params["uam_norm"]
    gap = global_avg_pool(x_H, vmem_limit=vmem)                     # (B, C, 1)
    gate = channel_gate(gap.reshape(B, C), s0, t0,
                        params["uam_wqkvT"], params["uam_wfcT"],
                        vmem_limit=vmem)                            # (B, C) = sigmoid+1
    gate3 = gate.reshape(B, C, 1)

    # --- DWSConv: gated depthwise 3x3 + BN + SELU, then 1x1 + BN + SELU ---
    s1, t1 = params["dws_bn1"]
    dws_cfg = [(3, 1, 1)]
    h_dw = fused_depthwise(x_H, _fold_taps([params["dws_dw_w"]], [s1]),
                           t1.reshape(C, 1), _tap_masks(dws_cfg, H, W), dws_cfg,
                           W=W, gate=gate3, vmem_limit=vmem)        # (B, 1, C, HW) bf16
    s2, t2 = params["dws_bn2"]
    h = pointwise(h_dw.reshape(B, C, HW), params["dws_pw_w_bf16"], s2, t2,
                  tile_cap=tile_cap, vmem_limit=vmem)               # (B, C, HW) f32 (= skip)

    # --- four dilated depthwise branches in ONE fused kernel (bf16 output), then
    #     the per-branch 1x1 reductions fused with "+ skip" ---
    b_cfgs = params["branch_cfg"]
    taps4 = _fold_taps(params["branch_dw_w"],
                       [s for (s, _) in params["branch_dw_bn"]])
    bias4 = jnp.stack([t for (_, t) in params["branch_dw_bn"]], axis=1)   # (C, NB)
    d_all = fused_depthwise(h, taps4, bias4, _tap_masks(b_cfgs, H, W), b_cfgs,
                            W=W, vmem_limit=vmem)                   # (B, NB, C, HW) bf16
    edge_m = branch_pointwise_skip(d_all, h, params["branch_pw_w_bf16"],
                                   params["branch_pw_s"], params["branch_pw_t"],
                                   tile_cap=tile_cap, vmem_limit=vmem)    # (B, C, HW) f32

    # --- final BasicConv2d(C, 1, 1) + SELU + ReLU fused with x + edge residual ---
    so, to = params["out_bn"]
    w_out = (params["out_w"][0] * so[0]).reshape(C, 1).astype(jnp.float32)
    x_out, edge = final_edge_residual(edge_m, x.reshape(B, C, HW), w_out, to,
                                      vmem_limit=vmem)
    return x_out.reshape(B, C, H, W), edge.reshape(B, 1, H, W)


if __name__ == "__main__":
    key = jax.random.PRNGKey(0)
    B, C, H, W = 2, 4, 16, 16
    radius = 4
    kx, kp = jax.random.split(key)
    x = jax.random.normal(kx, (B, C, H, W), dtype=jnp.float32)
    params = init_params(kp, C)

    x_out, edge = frequency_edge_forward(x, params, radius)
    jax.block_until_ready((x_out, edge))

    assert x_out.shape == (B, C, H, W)
    assert edge.shape == (B, 1, H, W)
    assert bool(jnp.all(jnp.isfinite(x_out))) and bool(jnp.all(jnp.isfinite(edge)))
    print("KERNEL_OK")
</pallas_src>

<mosaic_0001>
module attributes {stable_mosaic.version = 11 : i64} {
  func.func @_gap_kernel(%arg0: i32, %arg1: memref<1x4x256xf32, #tpu.memory_space<vmem>>, %arg2: memref<1x4x1xf32, #tpu.memory_space<vmem>>) attributes {dimension_semantics = [#tpu.dimension_semantics<parallel>], iteration_bounds = array<i64: 2>, scalar_prefetch = 0 : i64, scratch_operands = 0 : i64, tpu.core_type = #tpu.core_type<tc>, window_params = [{transform_indices = @transform_0, window_bounds = array<i64: 1, 4, 256>}, {transform_indices = @transform_1, window_bounds = array<i64: 1, 4, 1>}]} {
    %c0 = arith.constant 0 : index
    %c0_0 = arith.constant 0 : index
    %c0_1 = arith.constant 0 : index
    %0 = vector.load %arg1[%c0, %c0_0, %c0_1] : memref<1x4x256xf32, #tpu.memory_space<vmem>>, vector<1x4x256xf32>
    %1 = vector.shape_cast %0 : vector<1x4x256xf32> to vector<4x256xf32>
    %cst = arith.constant dense<0.000000e+00> : vector<4xf32>
    %2 = vector.multi_reduction <add>, %1, %cst [1] : vector<4x256xf32> to vector<4xf32>
    %3 = vector.shape_cast %2 : vector<4xf32> to vector<4x1xf32>
    %cst_2 = arith.constant 2.560000e+02 : f32
    %4 = vector.broadcast %cst_2 : f32 to vector<4x1xf32>
    %5 = arith.divf %3, %4 : vector<4x1xf32>
    %c0_3 = arith.constant 0 : index
    %c0_4 = arith.constant 0 : index
    %c0_5 = arith.constant 0 : index
    %6 = vector.load %arg2[%c0_3, %c0_4, %c0_5] : memref<1x4x1xf32, #tpu.memory_space<vmem>>, vector<1x4x1xf32>
    %7 = vector.shape_cast %6 : vector<1x4x1xf32> to vector<4x1xf32>
    %8 = vector.shape_cast %5 : vector<4x1xf32> to vector<1x4x1xf32>
    tpu.vector_store %arg2[%c0_3, %c0_4, %c0_5], %8 {strides = array<i32>} : memref<1x4x1xf32, #tpu.memory_space<vmem>>, vector<1x4x1xf32>,
    return
  }
  func.func @transform_0(%arg0: i32) -> (i32, i32, i32) {
    %c0_i32 = arith.constant 0 : i32
    %c0_i32_0 = arith.constant 0 : i32
    %c0_i32_1 = arith.constant 0 : i32
    return %arg0, %c0_i32, %c0_i32_0 : i32, i32, i32
  }
  func.func @transform_1(%arg0: i32) -> (i32, i32, i32) {
    %c0_i32 = arith.constant 0 : i32
    %c0_i32_0 = arith.constant 0 : i32
    %c0_i32_1 = arith.constant 0 : i32
    return %arg0, %c0_i32, %c0_i32_0 : i32, i32, i32
  }
}

</mosaic_0001>

<llo_original>
// kernel: tpu_custom_call.1
$region0: #{tpu_custom_call.1}
  #allocation0 [shape = 'u32[]', space=smem, size = 0x4, offset = 0x4, fixed_abs, tag = 'smem constant byte address 0x4 - core index']
  #allocation1 [shape = 'u32[72,128]{1,0:T(1,128)}', space=vmem, size = 0x9000, scoped, tag = 'internal scratch']
  %s0 = inlined_call_operand.hbm [shape: f32[2,4,256], index: 0, kind: input, shape index: {}]
  %s1 = inlined_call_operand.vmem [shape: f32[2,4,1], index: 1, kind: output, shape index: {}]
  %s2 = sld [smem:[#allocation0]]
  $region41: #{tpu_custom_call.1} parent=0
    _
  %s4 = ssub.s32 1, %s2
  %s5 = scalar_select 0, %s4, %s2
  $region1: #{tpu_custom_call.1} parent=0
    #allocation2 [shape = 'u8[8192]{0}', space=vmem, size = 0x2000, scoped, tag = 'input window, operand 0']
    #allocation3 [shape = 's32[2]{0}', space=sflag, size = 0x8, scoped, tag = 'scoped memory for tpu_custom_call.1']
    %6 = vsyncpa [#allocation3], 0
    %s7 = scalar_lea.sflag [#allocation3], 1
    %8 = vsyncpa %s7, 0
    loop: start=0, step=1, limit=4
    $region2: #{tpu_custom_call.1} parent=1 // loop_pre_header
      _
    $region3: #{tpu_custom_call.1} parent=1 // loop_header
      %s10 = sphi 0, %s14
      %p11 = scmp.ge.s32.totalorder %s10, 4
      %s20 = sphi 0, %s22
      %s23 = sphi 0, %s20
      %s24 = sphi 0, %s23
      %s40 = sphi 0, %s24
      %s46 = sphi 0, %s48
      %s49 = sphi 0, %s46
      %s50 = sphi 0, %s49
      %s66 = sphi 0, %s50
    $region4: #{tpu_custom_call.1} parent=1 // loop_header_branch
      %13 = sbr.rel (%p11) target = $region8
    $region5: #{tpu_custom_call.1} parent=1 // loop_body
      %s15 = ssub.s32 %s10, 1
      %s16 = ssub.s32 %s10, 2
      %s17 = sadd.s32 %s10, 1
      %s18 = ssub.s32 %s10, %s17
      %p19 = scmp.eq.s32.totalorder %s18, 0
      %s21 = sadd.s32 %s20, 1
      %s22 = scalar_select %p19, %s20, %s21
      %p25 = pneg %p19
      %p26 = scmp.eq.s32.totalorder %s10, 1
      %p27 = por %p25, %p26
      %p28 = scmp.ne.s32.totalorder %s20, %s23
      %p29 = scmp.eq.s32.totalorder %s10, 0
      %p30 = por %p28, %p29
      %p31 = scmp.ne.s32.totalorder %s20, %s23
      %p32 = scmp.eq.s32.totalorder %s15, 1
      %p33 = por %p31, %p32
      %p34 = scmp.ne.s32.totalorder %s23, %s24
      %p35 = scmp.eq.s32.totalorder %s15, 0
      %p36 = por %p34, %p35
      %p37 = scmp.ne.s32.totalorder %s23, %s24
      %p38 = scmp.eq.s32.totalorder %s16, 1
      %p39 = por %p37, %p38
      %p41 = scmp.ne.s32.totalorder %s24, %s40
      %p42 = scmp.eq.s32.totalorder %s16, 0
      %p43 = por %p41, %p42
      %s44 = ssub.s32 %s10, %s17
      %p45 = scmp.eq.s32.totalorder %s44, 0
      %s47 = sadd.s32 %s46, 1
      %s48 = scalar_select %p45, %s46, %s47
      %p51 = pneg %p45
      %p52 = scmp.eq.s32.totalorder %s10, 1
      %p53 = por %p51, %p52
      %p54 = scmp.ne.s32.totalorder %s46, %s49
      %p55 = scmp.eq.s32.totalorder %s10, 0
      %p56 = por %p54, %p55
      %p57 = scmp.ne.s32.totalorder %s46, %s49
      %p58 = scmp.eq.s32.totalorder %s15, 1
      %p59 = por %p57, %p58
      %p60 = scmp.ne.s32.totalorder %s49, %s50
      %p61 = scmp.eq.s32.totalorder %s15, 0
      %p62 = por %p60, %p61
      %p63 = scmp.ne.s32.totalorder %s49, %s50
      %p64 = scmp.eq.s32.totalorder %s16, 1
      %p65 = por %p63, %p64
      %p67 = scmp.ne.s32.totalorder %s50, %s66
      %p68 = scmp.eq.s32.totalorder %s16, 0
      %p69 = por %p67, %p68
      %p70 = scmp.le.s32.totalorder 1, %s10
      %p71 = scmp.lt.s32.totalorder %s10, 3
      %p72 = pnand %p70, %p71
      %p73 = pneg %p72
      // Predicated region
      $region9: #{tpu_custom_call.1} parent=5 // pred_check
        _
      $region10: #{tpu_custom_call.1} parent=5 // pred_check_branch
        %75 = sbr.rel (%p72) target = $region12
      $region11: #{tpu_custom_call.1} parent=5 // pred_region
        %s76 = ssub.s32 %s10, 1
      $region12: #{tpu_custom_call.1} parent=5 // pred_fallthru
        _
      %p77 = scmp.lt.s32.totalorder %s10, 2
      // Predicated region
      $region13: #{tpu_custom_call.1} parent=5 // pred_check
        %p78 = pneg %p77
      $region14: #{tpu_custom_call.1} parent=5 // pred_check_branch
        %80 = sbr.rel (%p78) target = $region16
      $region15: #{tpu_custom_call.1} parent=5 // pred_region
        // Predicated region
        $region17: #{tpu_custom_call.1} parent=15 // pred_check
          %p81 = pneg %p30
        $region18: #{tpu_custom_call.1} parent=15 // pred_check_branch
          %83 = sbr.rel (%p81) target = $region20
        $region19: #{tpu_custom_call.1} parent=15 // pred_region
          %s84 = sand.u32 %s20, 1
          %s85 = scalar_lea.sflag [#allocation3], %s84
          %s86 = sand.u32 %s20, 1
          %s87 = smul.addr %s86, 8
          %s88 = scalar_lea.vmem [#allocation2], %s87
          %90 = vsyncadd %s85, 0
          %s91 = smul.addr %s10, 2
          %s92 = smul.addr %s91, 4
          %s93 = scalar_lea.hbm %s0, %s92
          %s95 = sshll.u32 %s93, 4
          %s96 = int_to_ptr.hbm [resolvable:$true] %s95
          %s97 = sshll.u32 %s88, 4
          %s98 = int_to_ptr.vmem [resolvable:$true] %s97
          %100 = dma.hbm_to_vmem [thread:$0]  %s96, 128, %s98, %s85
        $region20: #{tpu_custom_call.1} parent=15 // pred_fallthru
          _
      $region16: #{tpu_custom_call.1} parent=5 // pred_fallthru
        _
      %p101 = scmp.le.s32.totalorder 1, %s10
      %p102 = scmp.lt.s32.totalorder %s10, 3
      %p103 = pnand %p101, %p102
      %p104 = pneg %p103
      // Predicated region
      $region21: #{tpu_custom_call.1} parent=5 // pred_check
        _
      $region22: #{tpu_custom_call.1} parent=5 // pred_check_branch
        %106 = sbr.rel (%p103) target = $region24
      $region23: #{tpu_custom_call.1} parent=5 // pred_region
        %s107 = ssub.s32 %s10, 1
        %s108 = sand.u32 %s23, 1
        %s109 = scalar_lea.sflag [#allocation3], %s108
        %s110 = sand.u32 %s23, 1
        %s111 = smul.addr %s110, 8
        %s112 = scalar_lea.vmem [#allocation2], %s111
        // Predicated region
        $region25: #{tpu_custom_call.1} parent=23 // pred_check
          %p113 = pneg %p36
        $region26: #{tpu_custom_call.1} parent=23 // pred_check_branch
          %115 = sbr.rel (%p113) target = $region28
        $region27: #{tpu_custom_call.1} parent=23 // pred_region
          %117 = dma.done %s109, 128
        $region28: #{tpu_custom_call.1} parent=23 // pred_fallthru
          _
        %s118 = sand.u32 %s23, 1
        %s119 = scalar_lea.sflag [#allocation3], %s118
        %s120 = sand.u32 %s23, 1
        %s121 = smul.addr %s120, 8
        %s122 = scalar_lea.vmem [#allocation2], %s121
        %p123 = pneg %p36
        %p124 = pneg %p33
        %p125 = pneg %p62
        %p126 = pneg %p59
        %p127 = scmp.lt.s32.totalorder %s15, 1
        %s128 = scalar_select %p127, %s15, 1
        %s129 = smul.addr %s128, 4
        %s130 = scalar_lea.vmem %s1, %s129
        %p131 = scmp.lt.s32.totalorder %s15, 1
        %s132 = scalar_select %p131, %s15, 1
        %s133 = smul.addr %s132, 4
        %s134 = scalar_lea.vmem %s1, %s133
        %v135 = vld [vmem:[%s112] sm:$0xff]
        %137 = vst [vmem:[#allocation1] ss:$2 sm:$0xff] %v135
        %v138 = vld.sshfl [vmem:[#allocation1] sm:$0xff pattern:$0x75316420]
        %v139 = vld.sshfl [vmem:[#allocation1 + $0x8] sm:$0xff pattern:$0x75316420]
        %vm142 = vcmask 1043456
        %v143 = vsel %vm142, %v138, 0.0
        %v144 = vsel %vm142, %v139, 0.0
        %v145 = vadd.f32 %v143, %v144
        %146 = vadd.xlane.f32.xlu0 %v145
        %v147 = vpop.xlane.xlu0 %146
        %v148 = vrcp.pop 256.0
        %v149 = vmul.f32 256.0, %v148
        %v150 = vsub.f32 1.0, %v149
        %v151 = vmul.f32 %v148, %v150
        %v152 = vadd.f32 %v148, %v151
        %vm153 = vweird.f32 %v148
        %v154 = vsel %vm153, %v148, %v152
        %v155 = vmul.f32 %v147, %v154
        %vm156 = vcmask 3072
        %157 = vst.msk [vmem:[%s134] sm:$0xf] %vm156, %v155
        %p158 = scmp.lt.s32.totalorder %s15, 1
        %s159 = scalar_select %p158, %s15, 1
        %s160 = smul.addr %s159, 4
        %s161 = scalar_lea.vmem %s1, %s160
        // Predicated region
        $region29: #{tpu_custom_call.1} parent=23 // pred_check
          %p162 = pneg %p59
        $region30: #{tpu_custom_call.1} parent=23 // pred_check_branch
          %164 = sbr.rel (%p162) target = $region32
        $region31: #{tpu_custom_call.1} parent=23 // pred_region
          _
        $region32: #{tpu_custom_call.1} parent=23 // pred_fallthru
          _
      $region24: #{tpu_custom_call.1} parent=5 // pred_fallthru
        _
      %p165 = scmp.le.s32.totalorder 2, %s10
      // Predicated region
      $region33: #{tpu_custom_call.1} parent=5 // pred_check
        %p166 = pneg %p165
      $region34: #{tpu_custom_call.1} parent=5 // pred_check_branch
        %168 = sbr.rel (%p166) target = $region36
      $region35: #{tpu_custom_call.1} parent=5 // pred_region
        %s169 = ssub.s32 %s10, 2
        // Predicated region
        $region37: #{tpu_custom_call.1} parent=35 // pred_check
          %p170 = pneg %p65
        $region38: #{tpu_custom_call.1} parent=35 // pred_check_branch
          %172 = sbr.rel (%p170) target = $region40
        $region39: #{tpu_custom_call.1} parent=35 // pred_region
          %p173 = scmp.lt.s32.totalorder %s16, 1
          %s174 = scalar_select %p173, %s16, 1
          %s175 = smul.addr %s174, 4
          %s176 = scalar_lea.vmem %s1, %s175
        $region40: #{tpu_custom_call.1} parent=35 // pred_fallthru
          _
      $region36: #{tpu_custom_call.1} parent=5 // pred_fallthru
        _
    $region6: #{tpu_custom_call.1} parent=1 // loop_footer
      %s14 = sadd.s32 1, %s10
    $region7: #{tpu_custom_call.1} parent=1 // loop_footer_branch
      %9 = sbr.rel target = $region3
    $region8: #{tpu_custom_call.1} parent=1 // loop_exit
      _
    %177 = vsyncpa [#allocation3], 1
    %s178 = scalar_lea.sflag [#allocation3], 1
    %179 = vsyncpa %s178, 1

</llo_original>
